<compile_context>
chip_gen: v6e
topology: v6e:2x2x1
jax: 0.10.0
libtpu: 0.0.40
codegen_flags: <defaults>
</compile_context>

<pallas_src>
import functools

import jax
import jax.numpy as jnp
from jax.experimental import pallas as pl
from jax.experimental.pallas import tpu as pltpu


def _round_up(n, m):
    return ((n + m - 1) // m) * m


def dnn_kernel(x_ref, w1_ref, w2_ref, w3_ref, w4t_ref, b_ref, o_ref):
    """relu(relu(relu(x@W1+b1)@W2+b2)@W3+b3)@W4+b4 on one batch tile.

    x_ref:  (bt, F)        unpadded features
    w1_ref: (F, 128)       w2_ref: (128, 256)   w3_ref: (256, 128)
    w4t_ref:(8, 128)       fc4 weight transposed + sublane-padded (row 0 real)
    b_ref:  (8, 256)       packed biases (rows 0..3 = b1..b4, zero-padded)
    o_ref:  (1, bt)        lane-dense output row (batch on the lane axis)
    """
    h = jnp.dot(x_ref[...], w1_ref[...], preferred_element_type=jnp.float32)
    h = jnp.maximum(h + b_ref[0:1, : w1_ref.shape[1]], 0.0)
    h = jnp.dot(h, w2_ref[...], preferred_element_type=jnp.float32)
    h = jnp.maximum(h + b_ref[1:2, : w2_ref.shape[1]], 0.0)
    h = jnp.dot(h, w3_ref[...], preferred_element_type=jnp.float32)
    h = jnp.maximum(h + b_ref[2:3, : w3_ref.shape[1]], 0.0)
    # Last layer with batch on the lane axis: (8, h3p) . (bt, h3p)^T -> (8, bt).
    # No explicit transpose — the contraction is expressed directly for the MXU.
    out = jax.lax.dot_general(
        w4t_ref[...], h,
        dimension_numbers=(((1,), (1,)), ((), ())),
        preferred_element_type=jnp.float32)
    o_ref[...] = out[0:1, :] + b_ref[3:4, 0:1]   # row 0 is the real output


def prepare_params(params):
    """One-time (outside the hot path) weight padding + bias packing.

    Zero padding is exact: padded weight rows/cols contribute 0 and padded
    bias lanes are 0, so ReLU keeps every padded lane at exactly 0.
    """
    (w1, b1), (w2, b2), (w3, b3), (w4, b4) = params
    h1, h2, h3 = w1.shape[1], w2.shape[1], w3.shape[1]
    h1p, h2p, h3p = (_round_up(d, 128) for d in (h1, h2, h3))
    blanes = max(h1p, h2p, h3p, 128)

    def pad2(a, rows, cols):
        z = jnp.zeros((rows, cols), jnp.float32)
        return z.at[: a.shape[0], : a.shape[1]].set(a.astype(jnp.float32))

    w1p = pad2(w1, w1.shape[0], h1p)           # (F, 128)   — F left unpadded
    w2p = pad2(w2, h1p, h2p)                   # (128, 256)
    w3p = pad2(w3, h2p, h3p)                   # (256, 128)
    w4t = pad2(w4.astype(jnp.float32).T, 8, h3p)   # (8, 128), row 0 real

    biases = jnp.zeros((8, blanes), jnp.float32)   # one small packed array
    for row, bias in enumerate((b1, b2, b3, b4)):
        bias = jnp.asarray(bias, jnp.float32).reshape(-1)
        biases = biases.at[row, : bias.shape[0]].set(bias)

    return (w1p, w2p, w3p, w4t, biases)


@functools.partial(jax.jit, static_argnames=("batch_tile",))
def dnn_forward(x, kparams, batch_tile=1024):
    # torch's x.squeeze() on a [B, 1, F] input -> [B, F].
    if x.ndim == 3:
        x = x[:, 0, :]
    elif x.ndim == 1:
        x = x[None, :]
    x = x.astype(jnp.float32)
    B, F = x.shape
    w1p, w2p, w3p, w4t, biases = kparams

    if B <= batch_tile:
        # Single grid step: block == full array (any B legal, no batch pad).
        bt, bp = B, B
    else:
        # Multi-step: lane-dense (1, bt) output blocks need bt % 128 == 0.
        assert batch_tile % 128 == 0, "batch_tile must be a multiple of 128"
        bt = batch_tile
        bp = bt * pl.cdiv(B, bt)
        # TODO(synk): on v7x pick bt so the step count is even for the 2 TCs.
    if bp != B:
        x = jnp.pad(x, ((0, bp - B), (0, 0)))   # batch-only pad (at most one tile)

    grid = (bp // bt,)

    def full_block(shape):
        return pl.BlockSpec(shape, lambda i: (0, 0))

    flops = 2 * bp * (F * w1p.shape[1] + w2p.shape[0] * w2p.shape[1]
                      + w3p.shape[0] * w3p.shape[1] + w4t.shape[1] * 8)
    bytes_accessed = 4 * (bp * F + w1p.size + w2p.size + w3p.size
                          + w4t.size + biases.size + bp)

    out_row = pl.pallas_call(
        dnn_kernel,
        out_shape=jax.ShapeDtypeStruct((1, bp), jnp.float32),
        grid_spec=pltpu.PrefetchScalarGridSpec(
            num_scalar_prefetch=0,
            grid=grid,
            in_specs=[
                pl.BlockSpec((bt, F), lambda i: (i, 0)),       # streaming x tile
                full_block(w1p.shape), full_block(w2p.shape),  # resident weights
                full_block(w3p.shape), full_block(w4t.shape),
                full_block(biases.shape),
            ],
            out_specs=pl.BlockSpec((1, bt), lambda i: (0, i)),
        ),
        compiler_params=pltpu.CompilerParams(
            dimension_semantics=("parallel",)),
        cost_estimate=pl.CostEstimate(
            flops=flops, transcendentals=0, bytes_accessed=bytes_accessed),
    )(x, w1p, w2p, w3p, w4t, biases)

    return out_row[0, :B].reshape(B, 1)


def init_params(key, input_size):
    """Deterministic init mimicking nn.Linear (uniform(-1/sqrt(fan_in), +))."""
    sizes = [(input_size, 100), (100, 150), (150, 120), (120, 1)]
    params = []
    for fan_in, fan_out in sizes:
        key, kw, kb = jax.random.split(key, 3)
        bound = 1.0 / jnp.sqrt(fan_in)
        # Stored as (in, out) so the kernel computes x @ W + b.
        w = jax.random.uniform(kw, (fan_in, fan_out), jnp.float32, -bound, bound)
        b = jax.random.uniform(kb, (1, fan_out), jnp.float32, -bound, bound)
        params.append((w, b))
    return params


def dnn_reference(x, params):
    if x.ndim == 3:
        x = x[:, 0, :]
    elif x.ndim == 1:
        x = x[None, :]
    (w1, b1), (w2, b2), (w3, b3), (w4, b4) = params
    dot = functools.partial(jnp.dot, precision=jax.lax.Precision.HIGHEST)
    h = jnp.maximum(dot(x, w1) + b1, 0.0)
    h = jnp.maximum(dot(h, w2) + b2, 0.0)
    h = jnp.maximum(dot(h, w3) + b3, 0.0)
    return dot(h, w4) + b4


if __name__ == "__main__":
    key = jax.random.PRNGKey(0)
    input_size = 32
    batch = 8

    kx, kp, kx2 = jax.random.split(key, 3)
    params = init_params(kp, input_size)
    kparams = prepare_params(params)          # one-time padding / packing

    # [B, 1, F] to exercise the squeeze() in the forward pass (single-step grid).
    x = jax.random.normal(kx, (batch, 1, input_size), jnp.float32)
    out = jax.block_until_ready(dnn_forward(x, kparams))
    ref = dnn_reference(x, params)
    assert out.shape == (batch, 1), out.shape
    assert jnp.allclose(out, ref, atol=1e-5, rtol=1e-5), "mismatch vs reference"

    # Small multi-step / ragged-batch check (grid of 3 tiles, batch-only pad).
    x2 = jax.random.normal(kx2, (300, input_size), jnp.float32)
    out2 = jax.block_until_ready(dnn_forward(x2, kparams, batch_tile=128))
    ref2 = dnn_reference(x2, params)
    assert out2.shape == (300, 1), out2.shape
    assert jnp.allclose(out2, ref2, atol=1e-5, rtol=1e-5), "mismatch (tiled) vs reference"

    print("KERNEL_OK")
</pallas_src>

<mosaic_0001>
module attributes {stable_mosaic.version = 11 : i64} {
  func.func @dnn_kernel(%arg0: i32, %arg1: memref<8x32xf32, #tpu.memory_space<vmem>>, %arg2: memref<32x128xf32, #tpu.memory_space<vmem>>, %arg3: memref<128x256xf32, #tpu.memory_space<vmem>>, %arg4: memref<256x128xf32, #tpu.memory_space<vmem>>, %arg5: memref<8x128xf32, #tpu.memory_space<vmem>>, %arg6: memref<8x256xf32, #tpu.memory_space<vmem>>, %arg7: memref<1x8xf32, #tpu.memory_space<vmem>>) attributes {dimension_semantics = [#tpu.dimension_semantics<parallel>], iteration_bounds = array<i64: 1>, scalar_prefetch = 0 : i64, scratch_operands = 0 : i64, tpu.core_type = #tpu.core_type<tc>, window_params = [{transform_indices = @transform_0, window_bounds = array<i64: 8, 32>}, {pipeline_mode = #tpu.pipeline_mode<synchronous>, transform_indices = @transform_1, window_bounds = array<i64: 32, 128>}, {pipeline_mode = #tpu.pipeline_mode<synchronous>, transform_indices = @transform_2, window_bounds = array<i64: 128, 256>}, {pipeline_mode = #tpu.pipeline_mode<synchronous>, transform_indices = @transform_3, window_bounds = array<i64: 256, 128>}, {pipeline_mode = #tpu.pipeline_mode<synchronous>, transform_indices = @transform_4, window_bounds = array<i64: 8, 128>}, {pipeline_mode = #tpu.pipeline_mode<synchronous>, transform_indices = @transform_5, window_bounds = array<i64: 8, 256>}, {transform_indices = @transform_6, window_bounds = array<i64: 1, 8>}]} {
    %c0 = arith.constant 0 : index
    %c0_0 = arith.constant 0 : index
    %0 = vector.load %arg1[%c0, %c0_0] : memref<8x32xf32, #tpu.memory_space<vmem>>, vector<8x32xf32>
    %c0_1 = arith.constant 0 : index
    %c0_2 = arith.constant 0 : index
    %1 = vector.load %arg2[%c0_1, %c0_2] : memref<32x128xf32, #tpu.memory_space<vmem>>, vector<32x128xf32>
    %cst = arith.constant dense<0.000000e+00> : vector<8x128xf32>
    %2 = tpu.matmul %0, %1, %cst {dimension_numbers = #tpu.dot_dimension_numbers<[1], [0], [0], [1], [0, 0, 1, 1], [], []>} : vector<8x32xf32>, vector<32x128xf32>, vector<8x128xf32> -> vector<8x128xf32>
    %c0_3 = arith.constant 0 : index
    %c0_4 = arith.constant 0 : index
    %3 = vector.load %arg6[%c0_3, %c0_4] : memref<8x256xf32, #tpu.memory_space<vmem>>, vector<1x128xf32>
    %4 = vector.broadcast %3 : vector<1x128xf32> to vector<8x128xf32>
    %5 = arith.addf %2, %4 : vector<8x128xf32>
    %cst_5 = arith.constant 0.000000e+00 : f32
    %6 = vector.broadcast %cst_5 : f32 to vector<8x128xf32>
    %7 = arith.maximumf %5, %6 : vector<8x128xf32>
    %c0_6 = arith.constant 0 : index
    %c0_7 = arith.constant 0 : index
    %8 = vector.load %arg3[%c0_6, %c0_7] : memref<128x256xf32, #tpu.memory_space<vmem>>, vector<128x256xf32>
    %cst_8 = arith.constant dense<0.000000e+00> : vector<8x256xf32>
    %9 = tpu.matmul %7, %8, %cst_8 {dimension_numbers = #tpu.dot_dimension_numbers<[1], [0], [0], [1], [0, 0, 1, 1], [], []>} : vector<8x128xf32>, vector<128x256xf32>, vector<8x256xf32> -> vector<8x256xf32>
    %c1 = arith.constant 1 : index
    %c0_9 = arith.constant 0 : index
    %10 = vector.load %arg6[%c1, %c0_9] : memref<8x256xf32, #tpu.memory_space<vmem>>, vector<1x256xf32>
    %11 = vector.broadcast %10 : vector<1x256xf32> to vector<8x256xf32>
    %12 = arith.addf %9, %11 : vector<8x256xf32>
    %cst_10 = arith.constant 0.000000e+00 : f32
    %13 = vector.broadcast %cst_10 : f32 to vector<8x256xf32>
    %14 = arith.maximumf %12, %13 : vector<8x256xf32>
    %c0_11 = arith.constant 0 : index
    %c0_12 = arith.constant 0 : index
    %15 = vector.load %arg4[%c0_11, %c0_12] : memref<256x128xf32, #tpu.memory_space<vmem>>, vector<256x128xf32>
    %cst_13 = arith.constant dense<0.000000e+00> : vector<8x128xf32>
    %16 = tpu.matmul %14, %15, %cst_13 {dimension_numbers = #tpu.dot_dimension_numbers<[1], [0], [0], [1], [0, 0, 1, 1], [], []>} : vector<8x256xf32>, vector<256x128xf32>, vector<8x128xf32> -> vector<8x128xf32>
    %c2 = arith.constant 2 : index
    %c0_14 = arith.constant 0 : index
    %17 = vector.load %arg6[%c2, %c0_14] : memref<8x256xf32, #tpu.memory_space<vmem>>, vector<1x128xf32>
    %18 = vector.broadcast %17 : vector<1x128xf32> to vector<8x128xf32>
    %19 = arith.addf %16, %18 : vector<8x128xf32>
    %cst_15 = arith.constant 0.000000e+00 : f32
    %20 = vector.broadcast %cst_15 : f32 to vector<8x128xf32>
    %21 = arith.maximumf %19, %20 : vector<8x128xf32>
    %c0_16 = arith.constant 0 : index
    %c0_17 = arith.constant 0 : index
    %22 = vector.load %arg5[%c0_16, %c0_17] : memref<8x128xf32, #tpu.memory_space<vmem>>, vector<8x128xf32>
    %cst_18 = arith.constant dense<0.000000e+00> : vector<8x8xf32>
    %23 = tpu.matmul %22, %21, %cst_18 {dimension_numbers = #tpu.dot_dimension_numbers<[1], [1], [0], [0], [0, 0, 1, 0], [], []>} : vector<8x128xf32>, vector<8x128xf32>, vector<8x8xf32> -> vector<8x8xf32>
    %24 = vector.extract_strided_slice %23 {offsets = [0, 0], sizes = [1, 8], strides = [1, 1]} : vector<8x8xf32> to vector<1x8xf32>
    %c3 = arith.constant 3 : index
    %c0_19 = arith.constant 0 : index
    %25 = vector.load %arg6[%c3, %c0_19] : memref<8x256xf32, #tpu.memory_space<vmem>>, vector<1x1xf32>
    %26 = vector.broadcast %25 : vector<1x1xf32> to vector<1x8xf32>
    %27 = arith.addf %24, %26 : vector<1x8xf32>
    %c0_20 = arith.constant 0 : index
    %c0_21 = arith.constant 0 : index
    %28 = vector.load %arg7[%c0_20, %c0_21] : memref<1x8xf32, #tpu.memory_space<vmem>>, vector<1x8xf32>
    tpu.vector_store %arg7[%c0_20, %c0_21], %27 {strides = array<i32>} : memref<1x8xf32, #tpu.memory_space<vmem>>, vector<1x8xf32>,
    return
  }
  func.func @transform_0(%arg0: i32) -> (i32, i32) {
    %c0_i32 = arith.constant 0 : i32
    %c0_i32_0 = arith.constant 0 : i32
    return %arg0, %c0_i32 : i32, i32
  }
  func.func @transform_1(%arg0: i32) -> (i32, i32) {
    %c0_i32 = arith.constant 0 : i32
    %c0_i32_0 = arith.constant 0 : i32
    %c0_i32_1 = arith.constant 0 : i32
    return %c0_i32, %c0_i32_0 : i32, i32
  }
  func.func @transform_2(%arg0: i32) -> (i32, i32) {
    %c0_i32 = arith.constant 0 : i32
    %c0_i32_0 = arith.constant 0 : i32
    %c0_i32_1 = arith.constant 0 : i32
    return %c0_i32, %c0_i32_0 : i32, i32
  }
  func.func @transform_3(%arg0: i32) -> (i32, i32) {
    %c0_i32 = arith.constant 0 : i32
    %c0_i32_0 = arith.constant 0 : i32
    %c0_i32_1 = arith.constant 0 : i32
    return %c0_i32, %c0_i32_0 : i32, i32
  }
  func.func @transform_4(%arg0: i32) -> (i32, i32) {
    %c0_i32 = arith.constant 0 : i32
    %c0_i32_0 = arith.constant 0 : i32
    %c0_i32_1 = arith.constant 0 : i32
    return %c0_i32, %c0_i32_0 : i32, i32
  }
  func.func @transform_5(%arg0: i32) -> (i32, i32) {
    %c0_i32 = arith.constant 0 : i32
    %c0_i32_0 = arith.constant 0 : i32
    %c0_i32_1 = arith.constant 0 : i32
    return %c0_i32, %c0_i32_0 : i32, i32
  }
  func.func @transform_6(%arg0: i32) -> (i32, i32) {
    %c0_i32 = arith.constant 0 : i32
    %c0_i32_0 = arith.constant 0 : i32
    return %c0_i32, %arg0 : i32, i32
  }
}

</mosaic_0001>

<llo_original>
// kernel: dnn_forward.1
$region0: #{dnn_forward.1}
  #allocation0 [shape = 'u32[]', space=smem, size = 0x4, offset = 0x4, fixed_abs, tag = 'smem constant byte address 0x4 - core index']
  #allocation1 [shape = 'u32[144,128]{1,0:T(1,128)}', space=vmem, size = 0x12000, scoped, tag = 'internal scratch']
  %s0 = inlined_call_operand.hbm [shape: f32[8,32], index: 0, kind: input, shape index: {}]
  %s1 = inlined_call_operand.hbm [shape: f32[32,128], index: 1, kind: input, shape index: {}]
  %s2 = inlined_call_operand.hbm [shape: f32[128,256], index: 2, kind: input, shape index: {}]
  %s3 = inlined_call_operand.hbm [shape: f32[256,128], index: 3, kind: input, shape index: {}]
  %s4 = inlined_call_operand.vmem [shape: f32[8,128], index: 4, kind: input, shape index: {}]
  %s5 = inlined_call_operand.hbm [shape: f32[8,256], index: 5, kind: input, shape index: {}]
  %s6 = inlined_call_operand.hbm [shape: f32[1,8], index: 6, kind: output, shape index: {}]
  %s7 = sld [smem:[#allocation0]]
  $region54: #{dnn_forward.1} parent=0
    _
  %s9 = ssub.s32 1, %s7
  %s10 = scalar_select 0, %s9, %s7
  $region1: #{dnn_forward.1} parent=0
    #allocation2 [shape = 'u8[4096]{0}', space=vmem, size = 0x1000, scoped, tag = 'input window, operand 0, single buffered']
    #allocation3 [shape = 's32[1]{0}', space=sflag, size = 0x4, scoped, tag = 'scoped memory for dnn_forward.1']
    #allocation4 [shape = 's32[1]{0}', space=sflag, size = 0x4, scoped, tag = 'scoped memory for dnn_forward.1']
    #allocation5 [shape = 'u8[16384]{0}', space=vmem, size = 0x4000, scoped, tag = 'input window, operand 1, single buffered']
    #allocation6 [shape = 's32[1]{0}', space=sflag, size = 0x4, scoped, tag = 'scoped memory for dnn_forward.1']
    #allocation7 [shape = 'u8[131072]{0}', space=vmem, size = 0x20000, scoped, tag = 'input window, operand 2, single buffered']
    #allocation8 [shape = 'u8[131072]{0}', space=vmem, size = 0x20000, scoped, tag = 'input window, operand 3, single buffered']
    #allocation9 [shape = 's32[1]{0}', space=sflag, size = 0x4, scoped, tag = 'scoped memory for dnn_forward.1']
    #allocation10 [shape = 'u8[8192]{0}', space=vmem, size = 0x2000, scoped, tag = 'input window, operand 5, single buffered']
    #allocation11 [shape = 'u8[512]{0}', space=vmem, size = 0x400, scoped, tag = 'output window, operand 0, single buffered']
    %11 = vsyncpa [#allocation3], 0
    %12 = vsyncpa [#allocation6], 0
    %13 = vsyncpa [#allocation9], 0
    %14 = vsyncpa [#allocation4], 0
    // Predicated region
    $region2: #{dnn_forward.1} parent=1 // pred_check
      _
    $region3: #{dnn_forward.1} parent=1 // pred_check_branch
      %16 = sbr.rel (0) target = $region5
    $region4: #{dnn_forward.1} parent=1 // pred_region
      %s18 = ssub.s32 128, 128
      %19 = vsyncadd [#allocation3], %s18
      %s21 = sshll.u32 [#allocation2], 4
      %s22 = int_to_ptr.vmem [resolvable:$true] %s21
      %24 = dma.hbm_to_vmem [thread:$0]  %s0, 128, %s22, [#allocation3]
    $region5: #{dnn_forward.1} parent=1 // pred_fallthru
      _
    // Predicated region
    $region6: #{dnn_forward.1} parent=1 // pred_check
      _
    $region7: #{dnn_forward.1} parent=1 // pred_check_branch
      %26 = sbr.rel (0) target = $region9
    $region8: #{dnn_forward.1} parent=1 // pred_region
      %s28 = ssub.s32 512, 512
      %29 = vsyncadd [#allocation6], %s28
      %s30 = sshll.u32 [#allocation5], 4
      %s31 = int_to_ptr.vmem [resolvable:$true] %s30
      %36 = dma.hbm_to_vmem [thread:$0]  %s1, 512, %s31, [#allocation6], 128, 128, 8
    $region9: #{dnn_forward.1} parent=1 // pred_fallthru
      _
    // Predicated region
    $region10: #{dnn_forward.1} parent=1 // pred_check
      _
    $region11: #{dnn_forward.1} parent=1 // pred_check_branch
      %38 = sbr.rel (0) target = $region13
    $region12: #{dnn_forward.1} parent=1 // pred_region
      %s40 = ssub.s32 4096, 4096
      %41 = vsyncadd [#allocation6], %s40
      %s42 = sshll.u32 [#allocation7], 4
      %s43 = int_to_ptr.vmem [resolvable:$true] %s42
      %48 = dma.hbm_to_vmem [thread:$0]  %s2, 4096, %s43, [#allocation6], 256, 256, 16
    $region13: #{dnn_forward.1} parent=1 // pred_fallthru
      _
    // Predicated region
    $region14: #{dnn_forward.1} parent=1 // pred_check
      _
    $region15: #{dnn_forward.1} parent=1 // pred_check_branch
      %50 = sbr.rel (0) target = $region17
    $region16: #{dnn_forward.1} parent=1 // pred_region
      %s52 = ssub.s32 4096, 4096
      %53 = vsyncadd [#allocation9], %s52
      %s54 = sshll.u32 [#allocation8], 4
      %s55 = int_to_ptr.vmem [resolvable:$true] %s54
      %60 = dma.hbm_to_vmem [thread:$0]  %s3, 4096, %s55, [#allocation9], 128, 128, 8
    $region17: #{dnn_forward.1} parent=1 // pred_fallthru
      _
    // Predicated region
    $region18: #{dnn_forward.1} parent=1 // pred_check
      _
    $region19: #{dnn_forward.1} parent=1 // pred_check_branch
      %62 = sbr.rel (0) target = $region21
    $region20: #{dnn_forward.1} parent=1 // pred_region
      _
    $region21: #{dnn_forward.1} parent=1 // pred_fallthru
      _
    // Predicated region
    $region22: #{dnn_forward.1} parent=1 // pred_check
      _
    $region23: #{dnn_forward.1} parent=1 // pred_check_branch
      %64 = sbr.rel (0) target = $region25
    $region24: #{dnn_forward.1} parent=1 // pred_region
      %s66 = ssub.s32 256, 256
      %67 = vsyncadd [#allocation9], %s66
      %s69 = sshll.u32 [#allocation10], 4
      %s70 = int_to_ptr.vmem [resolvable:$true] %s69
      %72 = dma.hbm_to_vmem [thread:$0]  %s5, 256, %s70, [#allocation9]
    $region25: #{dnn_forward.1} parent=1 // pred_fallthru
      _
    // Predicated region
    $region26: #{dnn_forward.1} parent=1 // pred_check
      _
    $region27: #{dnn_forward.1} parent=1 // pred_check_branch
      %74 = sbr.rel (0) target = $region29
    $region28: #{dnn_forward.1} parent=1 // pred_region
      %75 = dma.done [#allocation3], 128
    $region29: #{dnn_forward.1} parent=1 // pred_fallthru
      _
    // Predicated region
    $region30: #{dnn_forward.1} parent=1 // pred_check
      _
    $region31: #{dnn_forward.1} parent=1 // pred_check_branch
      %77 = sbr.rel (0) target = $region33
    $region32: #{dnn_forward.1} parent=1 // pred_region
      %78 = dma.done [#allocation6], 512
    $region33: #{dnn_forward.1} parent=1 // pred_fallthru
      _
    // Predicated region
    $region34: #{dnn_forward.1} parent=1 // pred_check
      _
    $region35: #{dnn_forward.1} parent=1 // pred_check_branch
      %80 = sbr.rel (0) target = $region37
    $region36: #{dnn_forward.1} parent=1 // pred_region
      %81 = dma.done [#allocation6], 4096
    $region37: #{dnn_forward.1} parent=1 // pred_fallthru
      _
    // Predicated region
    $region38: #{dnn_forward.1} parent=1 // pred_check
      _
    $region39: #{dnn_forward.1} parent=1 // pred_check_branch
      %83 = sbr.rel (0) target = $region41
    $region40: #{dnn_forward.1} parent=1 // pred_region
      %84 = dma.done [#allocation9], 4096
    $region41: #{dnn_forward.1} parent=1 // pred_fallthru
      _
    // Predicated region
    $region42: #{dnn_forward.1} parent=1 // pred_check
      _
    $region43: #{dnn_forward.1} parent=1 // pred_check_branch
      %86 = sbr.rel (0) target = $region45
    $region44: #{dnn_forward.1} parent=1 // pred_region
      %87 = dma.done [#allocation9], 256
    $region45: #{dnn_forward.1} parent=1 // pred_fallthru
      _
    %v88 = vld [vmem:[#allocation2] sm:$0xff]
    %v89 = vld [vmem:[#allocation5] sm:$0xff]
    %v90 = vld [vmem:[#allocation5 + $0x8] sm:$0xff]
    %v91 = vld [vmem:[#allocation5 + $0x10] sm:$0xff]
    %v92 = vld [vmem:[#allocation5 + $0x18] sm:$0xff]
    %v93 = vld [vmem:[#allocation10] ss:$0 sm:$0xff]
    %vm94 = vcmask 261120
    %v96 = vsel %vm94, %v88, 0
    %98 = vmatprep.subr.mxu0 0.0
    %99 = vmatpush1.msra.mxu0 0.0
    %100 = vmatprep.subr.mxu0 0.0
    %101 = vmatpush1.msra.mxu0 0.0
    %102 = vmatprep.subr.mxu0 0.0
    %103 = vmatpush1.msra.mxu0 0.0
    %104 = vmatprep.subr.mxu0 0.0
    %105 = vmatpush1.msra.mxu0 0.0
    %106 = vmatprep.subr.mxu0 0.0
    %107 = vmatpush1.msra.mxu0 0.0
    %108 = vmatprep.subr.mxu0 0.0
    %109 = vmatpush1.msra.mxu0 0.0
    %110 = vmatprep.subr.mxu0 0.0
    %111 = vmatpush1.msra.mxu0 0.0
    %112 = vmatprep.subr.mxu0 0.0
    %113 = vmatpush1.msra.mxu0 0.0
    %114 = vmatprep.subr.mxu0 0.0
    %115 = vmatpush1.msra.mxu0 0.0
    %116 = vmatprep.subr.mxu0 0.0
    %117 = vmatpush1.msra.mxu0 0.0
    %118 = vmatprep.subr.mxu0 0.0
    %119 = vmatpush1.msra.mxu0 0.0
    %120 = vmatprep.subr.mxu0 0.0
    %121 = vmatpush1.msra.mxu0 0.0
    %122 = vmatprep.subr.mxu0 0.0
    %123 = vmatpush1.msra.mxu0 %v92
    %124 = vmatprep.subr.mxu0 0.0
    %125 = vmatpush1.msra.mxu0 %v91
    %126 = vmatprep.subr.mxu0 0.0
    %127 = vmatpush1.msra.mxu0 %v90
    %128 = vmatprep.subr.mxu0 0.0
    %129 = vmatpush1.msra.mxu0 %v89
    %130 = vmatprep.subr.mxu0 0.0
    %131 = vmatpush2.msra.mxu0 0.0
    %132 = vmatprep.subr.mxu0 0.0
    %133 = vmatpush2.msra.mxu0 0.0
    %134 = vmatprep.subr.mxu0 0.0
    %135 = vmatpush2.msra.mxu0 0.0
    %136 = vmatprep.subr.mxu0 0.0
    %137 = vmatpush2.msra.mxu0 0.0
    %138 = vmatprep.subr.mxu0 0.0
    %139 = vmatpush2.msra.mxu0 0.0
    %140 = vmatprep.subr.mxu0 0.0
    %141 = vmatpush2.msra.mxu0 0.0
    %142 = vmatprep.subr.mxu0 0.0
    %143 = vmatpush2.msra.mxu0 0.0
    %144 = vmatprep.subr.mxu0 0.0
    %145 = vmatpush2.msra.mxu0 0.0
    %146 = vmatprep.subr.mxu0 0.0
    %147 = vmatpush2.msra.mxu0 0.0
    %148 = vmatprep.subr.mxu0 0.0
    %149 = vmatpush2.msra.mxu0 0.0
    %150 = vmatprep.subr.mxu0 0.0
    %151 = vmatpush2.msra.mxu0 0.0
    %152 = vmatprep.subr.mxu0 0.0
    %153 = vmatpush2.msra.mxu0 0.0
    %154 = vmatprep.subr.mxu0 0.0
    %155 = vmatpush2.msra.mxu0 0.0
    %156 = vmatprep.subr.mxu0 0.0
    %157 = vmatpush2.msra.mxu0 0.0
    %158 = vmatprep.subr.mxu0 0.0
    %159 = vmatpush2.msra.mxu0 0.0
    %160 = vmatprep.subr.mxu0 0.0
    %161 = vmatpush2.msra.mxu0 0.0
    %162 = vmatprep.mubr.f32.mxu0 0.0
    %163 = vmatmul.mubr.f32.gmra.mxu0 %v96
    %v164 = vpop.f32.mrf.mxu0
    %v165 = vadd.f32 %v93, %v164
    %v166 = vpop.f32.mrf.mxu0
    %167 = vdwg.mxu0
    %v168 = vmax.f32 %v165, 0.0
    %v169 = vld [vmem:[#allocation7] sm:$0xff]
    %v170 = vld [vmem:[#allocation7 + $0x8] sm:$0xff]
    %v171 = vld [vmem:[#allocation7 + $0x10] sm:$0xff]
    %v172 = vld [vmem:[#allocation7 + $0x18] sm:$0xff]
    %v173 = vld [vmem:[#allocation7 + $0x20] sm:$0xff]
    %v174 = vld [vmem:[#allocation7 + $0x28] sm:$0xff]
    %v175 = vld [vmem:[#allocation7 + $0x30] sm:$0xff]
    %v176 = vld [vmem:[#allocation7 + $0x38] sm:$0xff]
    %v177 = vld [vmem:[#allocation7 + $0x40] sm:$0xff]
    %v178 = vld [vmem:[#allocation7 + $0x48] sm:$0xff]
    %v179 = vld [vmem:[#allocation7 + $0x50] sm:$0xff]
    %v180 = vld [vmem:[#allocation7 + $0x58] sm:$0xff]
    %v181 = vld [vmem:[#allocation7 + $0x60] sm:$0xff]
    %v182 = vld [vmem:[#allocation7 + $0x68] sm:$0xff]
    %v183 = vld [vmem:[#allocation7 + $0x70] sm:$0xff]
    %v184 = vld [vmem:[#allocation7 + $0x78] sm:$0xff]
    %v185 = vld [vmem:[#allocation7 + $0x80] sm:$0xff]
    %v186 = vld [vmem:[#allocation7 + $0x88] sm:$0xff]
    %v187 = vld [vmem:[#allocation7 + $0x90] sm:$0xff]
    %v188 = vld [vmem:[#allocation7 + $0x98] sm:$0xff]
    %v189 = vld [vmem:[#allocation7 + $0xa0] sm:$0xff]
    %v190 = vld [vmem:[#allocation7 + $0xa8] sm:$0xff]
    %v191 = vld [vmem:[#allocation7 + $0xb0] sm:$0xff]
    %v192 = vld [vmem:[#allocation7 + $0xb8] sm:$0xff]
    %v193 = vld [vmem:[#allocation7 + $0xc0] sm:$0xff]
    %v194 = vld [vmem:[#allocation7 + $0xc8] sm:$0xff]
    %v195 = vld [vmem:[#allocation7 + $0xd0] sm:$0xff]
    %v196 = vld [vmem:[#allocation7 + $0xd8] sm:$0xff]
    %v197 = vld [vmem:[#allocation7 + $0xe0] sm:$0xff]
    %v198 = vld [vmem:[#allocation7 + $0xe8] sm:$0xff]
    %v199 = vld [vmem:[#allocation7 + $0xf0] sm:$0xff]
    %v200 = vld [vmem:[#allocation7 + $0xf8] sm:$0xff]
    %s201 = scalar_lea.vmem [#allocation10], 1
    %v202 = vld [vmem:[%s201] ss:$8 sm:$0x3]
    %v204 = vlaneseq
    %v205 = vshrl.u32 %v204, 7
    %v206 = vsub.s32 0, %v205
    %v207 = vrot.slane %v202, %v206
    %v208 = vlaneseq
    %v209 = vshrl.u32 %v208, 7
    %v210 = vsub.s32 1, %v209
    %v211 = vrot.slane %v202, %v210
    %214 = vmatprep.subr.mxu0 %v200
    %215 = vmatpush1.msra.mxu0 %v199
    %216 = vmatprep.subr.mxu0 %v198
    %217 = vmatpush1.msra.mxu0 %v197
    %218 = vmatprep.subr.mxu0 %v196
    %219 = vmatpush1.msra.mxu0 %v195
    %220 = vmatprep.subr.mxu0 %v194
    %221 = vmatpush1.msra.mxu0 %v193
    %222 = vmatprep.subr.mxu0 %v192
    %223 = vmatpush1.msra.mxu0 %v191
    %224 = vmatprep.subr.mxu0 %v190
    %225 = vmatpush1.msra.mxu0 %v189
    %226 = vmatprep.subr.mxu0 %v188
    %227 = vmatpush1.msra.mxu0 %v187
    %228 = vmatprep.subr.mxu0 %v186
    %229 = vmatpush1.msra.mxu0 %v185
    %230 = vmatprep.subr.mxu0 %v184
    %231 = vmatpush1.msra.mxu0 %v183
    %232 = vmatprep.subr.mxu0 %v182
    %233 = vmatpush1.msra.mxu0 %v181
    %234 = vmatprep.subr.mxu0 %v180
    %235 = vmatpush1.msra.mxu0 %v179
    %236 = vmatprep.subr.mxu0 %v178
    %237 = vmatpush1.msra.mxu0 %v177
    %238 = vmatprep.subr.mxu0 %v176
    %239 = vmatpush1.msra.mxu0 %v175
    %240 = vmatprep.subr.mxu0 %v174
    %241 = vmatpush1.msra.mxu0 %v173
    %242 = vmatprep.subr.mxu0 %v172
    %243 = vmatpush1.msra.mxu0 %v171
    %244 = vmatprep.subr.mxu0 %v170
    %245 = vmatpush1.msra.mxu0 %v169
    %246 = vmatprep.subr.mxu0 0.0
    %247 = vmatpush2.msra.mxu0 0.0
    %248 = vmatprep.subr.mxu0 0.0
    %249 = vmatpush2.msra.mxu0 0.0
    %250 = vmatprep.subr.mxu0 0.0
    %251 = vmatpush2.msra.mxu0 0.0
    %252 = vmatprep.subr.mxu0 0.0
    %253 = vmatpush2.msra.mxu0 0.0
    %254 = vmatprep.subr.mxu0 0.0
    %255 = vmatpush2.msra.mxu0 0.0
    %256 = vmatprep.subr.mxu0 0.0
    %257 = vmatpush2.msra.mxu0 0.0
    %258 = vmatprep.subr.mxu0 0.0
    %259 = vmatpush2.msra.mxu0 0.0
    %260 = vmatprep.subr.mxu0 0.0
    %261 = vmatpush2.msra.mxu0 0.0
    %262 = vmatprep.subr.mxu0 0.0
    %263 = vmatpush2.msra.mxu0 0.0
    %264 = vmatprep.subr.mxu0 0.0
    %265 = vmatpush2.msra.mxu0 0.0
    %266 = vmatprep.subr.mxu0 0.0
    %267 = vmatpush2.msra.mxu0 0.0
    %268 = vmatprep.subr.mxu0 0.0
    %269 = vmatpush2.msra.mxu0 0.0
    %270 = vmatprep.subr.mxu0 0.0
    %271 = vmatpush2.msra.mxu0 0.0
    %272 = vmatprep.subr.mxu0 0.0
    %273 = vmatpush2.msra.mxu0 0.0
    %274 = vmatprep.subr.mxu0 0.0
    %275 = vmatpush2.msra.mxu0 0.0
    %276 = vmatprep.subr.mxu0 0.0
    %277 = vmatpush2.msra.mxu0 0.0
    %278 = vmatprep.mubr.f32.mxu0 0.0
    %279 = vmatmul.mubr.f32.gmra.mxu0 %v168
    %v280 = vpop.f32.mrf.mxu0
    %v281 = vadd.f32 %v207, %v280
    %v282 = vpop.f32.mrf.mxu0
    %v283 = vadd.f32 %v211, %v282
    %284 = vdwg.mxu0
    %v285 = vmax.f32 %v281, 0.0
    %v286 = vmax.f32 %v283, 0.0
    %v287 = vld [vmem:[#allocation8] sm:$0xff]
    %v288 = vld [vmem:[#allocation8 + $0x8] sm:$0xff]
    %v289 = vld [vmem:[#allocation8 + $0x10] sm:$0xff]
    %v290 = vld [vmem:[#allocation8 + $0x18] sm:$0xff]
    %v291 = vld [vmem:[#allocation8 + $0x20] sm:$0xff]
    %v292 = vld [vmem:[#allocation8 + $0x28] sm:$0xff]
    %v293 = vld [vmem:[#allocation8 + $0x30] sm:$0xff]
    %v294 = vld [vmem:[#allocation8 + $0x38] sm:$0xff]
    %v295 = vld [vmem:[#allocation8 + $0x40] sm:$0xff]
    %v296 = vld [vmem:[#allocation8 + $0x48] sm:$0xff]
    %v297 = vld [vmem:[#allocation8 + $0x50] sm:$0xff]
    %v298 = vld [vmem:[#allocation8 + $0x58] sm:$0xff]
    %v299 = vld [vmem:[#allocation8 + $0x60] sm:$0xff]
    %v300 = vld [vmem:[#allocation8 + $0x68] sm:$0xff]
    %v301 = vld [vmem:[#allocation8 + $0x70] sm:$0xff]
    %v302 = vld [vmem:[#allocation8 + $0x78] sm:$0xff]
    %v303 = vld [vmem:[#allocation8 + $0x80] sm:$0xff]
    %v304 = vld [vmem:[#allocation8 + $0x88] sm:$0xff]
    %v305 = vld [vmem:[#allocation8 + $0x90] sm:$0xff]
    %v306 = vld [vmem:[#allocation8 + $0x98] sm:$0xff]
    %v307 = vld [vmem:[#allocation8 + $0xa0] sm:$0xff]
    %v308 = vld [vmem:[#allocation8 + $0xa8] sm:$0xff]
    %v309 = vld [vmem:[#allocation8 + $0xb0] sm:$0xff]
    %v310 = vld [vmem:[#allocation8 + $0xb8] sm:$0xff]
    %v311 = vld [vmem:[#allocation8 + $0xc0] sm:$0xff]
    %v312 = vld [vmem:[#allocation8 + $0xc8] sm:$0xff]
    %v313 = vld [vmem:[#allocation8 + $0xd0] sm:$0xff]
    %v314 = vld [vmem:[#allocation8 + $0xd8] sm:$0xff]
    %v315 = vld [vmem:[#allocation8 + $0xe0] sm:$0xff]
    %v316 = vld [vmem:[#allocation8 + $0xe8] sm:$0xff]
    %v317 = vld [vmem:[#allocation8 + $0xf0] sm:$0xff]
    %v318 = vld [vmem:[#allocation8 + $0xf8] sm:$0xff]
    %v319 = vld [vmem:[#allocation10 + $0x2] ss:$0 sm:$0xff]
    %320 = vmatprep.subr.mxu0 0.0
    %321 = vmatpush1.msra.mxu0 %v302
    %322 = vmatprep.subr.mxu0 0.0
    %323 = vmatpush1.msra.mxu0 %v301
    %324 = vmatprep.subr.mxu0 0.0
    %325 = vmatpush1.msra.mxu0 %v300
    %326 = vmatprep.subr.mxu0 0.0
    %327 = vmatpush1.msra.mxu0 %v299
    %328 = vmatprep.subr.mxu0 0.0
    %329 = vmatpush1.msra.mxu0 %v298
    %330 = vmatprep.subr.mxu0 0.0
    %331 = vmatpush1.msra.mxu0 %v297
    %332 = vmatprep.subr.mxu0 0.0
    %333 = vmatpush1.msra.mxu0 %v296
    %334 = vmatprep.subr.mxu0 0.0
    %335 = vmatpush1.msra.mxu0 %v295
    %336 = vmatprep.subr.mxu0 0.0
    %337 = vmatpush1.msra.mxu0 %v294
    %338 = vmatprep.subr.mxu0 0.0
    %339 = vmatpush1.msra.mxu0 %v293
    %340 = vmatprep.subr.mxu0 0.0
    %341 = vmatpush1.msra.mxu0 %v292
    %342 = vmatprep.subr.mxu0 0.0
    %343 = vmatpush1.msra.mxu0 %v291
    %344 = vmatprep.subr.mxu0 0.0
    %345 = vmatpush1.msra.mxu0 %v290
    %346 = vmatprep.subr.mxu0 0.0
    %347 = vmatpush1.msra.mxu0 %v289
    %348 = vmatprep.subr.mxu0 0.0
    %349 = vmatpush1.msra.mxu0 %v288
    %350 = vmatprep.subr.mxu0 0.0
    %351 = vmatpush1.msra.mxu0 %v287
    %352 = vmatprep.subr.mxu0 0.0
    %353 = vmatpush2.msra.mxu0 %v318
    %354 = vmatprep.subr.mxu0 0.0
    %355 = vmatpush2.msra.mxu0 %v317
    %356 = vmatprep.subr.mxu0 0.0
    %357 = vmatpush2.msra.mxu0 %v316
    %358 = vmatprep.subr.mxu0 0.0
    %359 = vmatpush2.msra.mxu0 %v315
    %360 = vmatprep.subr.mxu0 0.0
    %361 = vmatpush2.msra.mxu0 %v314
    %362 = vmatprep.subr.mxu0 0.0
    %363 = vmatpush2.msra.mxu0 %v313
    %364 = vmatprep.subr.mxu0 0.0
    %365 = vmatpush2.msra.mxu0 %v312
    %366 = vmatprep.subr.mxu0 0.0
    %367 = vmatpush2.msra.mxu0 %v311
    %368 = vmatprep.subr.mxu0 0.0
    %369 = vmatpush2.msra.mxu0 %v310
    %370 = vmatprep.subr.mxu0 0.0
    %371 = vmatpush2.msra.mxu0 %v309
    %372 = vmatprep.subr.mxu0 0.0
    %373 = vmatpush2.msra.mxu0 %v308
    %374 = vmatprep.subr.mxu0 0.0
    %375 = vmatpush2.msra.mxu0 %v307
    %376 = vmatprep.subr.mxu0 0.0
    %377 = vmatpush2.msra.mxu0 %v306
    %378 = vmatprep.subr.mxu0 0.0
    %379 = vmatpush2.msra.mxu0 %v305
    %380 = vmatprep.subr.mxu0 0.0
    %381 = vmatpush2.msra.mxu0 %v304
    %382 = vmatprep.subr.mxu0 0.0
    %383 = vmatpush2.msra.mxu0 %v303
    %384 = vmatprep.mubr.f32.mxu0 %v286
    %385 = vmatmul.mubr.f32.gmra.mxu0 %v285
    %v386 = vpop.f32.mrf.mxu0
    %v387 = vadd.f32 %v319, %v386
    %v388 = vpop.f32.mrf.mxu0
    %389 = vdwg.mxu0
    %v390 = vmax.f32 %v387, 0.0
    %v391 = vld [vmem:[%s4] sm:$0xff]
    %392 = vmatprep.subr.mxu0 0.0
    %393 = vmatpush1.xpose.msra.mxu0 0.0
    %394 = vmatprep.subr.mxu0 0.0
    %395 = vmatpush1.xpose.msra.mxu0 0.0
    %396 = vmatprep.subr.mxu0 0.0
    %397 = vmatpush1.xpose.msra.mxu0 0.0
    %398 = vmatprep.subr.mxu0 0.0
    %399 = vmatpush1.xpose.msra.mxu0 0.0
    %400 = vmatprep.subr.mxu0 0.0
    %401 = vmatpush1.xpose.msra.mxu0 0.0
    %402 = vmatprep.subr.mxu0 0.0
    %403 = vmatpush1.xpose.msra.mxu0 0.0
    %404 = vmatprep.subr.mxu0 0.0
    %405 = vmatpush1.xpose.msra.mxu0 0.0
    %406 = vmatprep.subr.mxu0 0.0
    %407 = vmatpush1.xpose.msra.mxu0 0.0
    %408 = vmatprep.subr.mxu0 0.0
    %409 = vmatpush1.xpose.msra.mxu0 0.0
    %410 = vmatprep.subr.mxu0 0.0
    %411 = vmatpush1.xpose.msra.mxu0 0.0
    %412 = vmatprep.subr.mxu0 0.0
    %413 = vmatpush1.xpose.msra.mxu0 0.0
    %414 = vmatprep.subr.mxu0 0.0
    %415 = vmatpush1.xpose.msra.mxu0 0.0
    %416 = vmatprep.subr.mxu0 0.0
    %417 = vmatpush1.xpose.msra.mxu0 0.0
    %418 = vmatprep.subr.mxu0 0.0
    %419 = vmatpush1.xpose.msra.mxu0 0.0
    %420 = vmatprep.subr.mxu0 0.0
    %421 = vmatpush1.xpose.msra.mxu0 0.0
    %422 = vmatprep.subr.mxu0 0.0
    %423 = vmatpush1.xpose.msra.mxu0 %v390
    %424 = vmatprep.subr.mxu0 0.0
    %425 = vmatpush2.xpose.msra.mxu0 0.0
    %426 = vmatprep.subr.mxu0 0.0
    %427 = vmatpush2.xpose.msra.mxu0 0.0
    %428 = vmatprep.subr.mxu0 0.0
    %429 = vmatpush2.xpose.msra.mxu0 0.0
    %430 = vmatprep.subr.mxu0 0.0
    %431 = vmatpush2.xpose.msra.mxu0 0.0
    %432 = vmatprep.subr.mxu0 0.0
    %433 = vmatpush2.xpose.msra.mxu0 0.0
    %434 = vmatprep.subr.mxu0 0.0
    %435 = vmatpush2.xpose.msra.mxu0 0.0
    %436 = vmatprep.subr.mxu0 0.0
    %437 = vmatpush2.xpose.msra.mxu0 0.0
    %438 = vmatprep.subr.mxu0 0.0
    %439 = vmatpush2.xpose.msra.mxu0 0.0
    %440 = vmatprep.subr.mxu0 0.0
    %441 = vmatpush2.xpose.msra.mxu0 0.0
    %442 = vmatprep.subr.mxu0 0.0
    %443 = vmatpush2.xpose.msra.mxu0 0.0
    %444 = vmatprep.subr.mxu0 0.0
    %445 = vmatpush2.xpose.msra.mxu0 0.0
    %446 = vmatprep.subr.mxu0 0.0
    %447 = vmatpush2.xpose.msra.mxu0 0.0
    %448 = vmatprep.subr.mxu0 0.0
    %449 = vmatpush2.xpose.msra.mxu0 0.0
    %450 = vmatprep.subr.mxu0 0.0
    %451 = vmatpush2.xpose.msra.mxu0 0.0
    %452 = vmatprep.subr.mxu0 0.0
    %453 = vmatpush2.xpose.msra.mxu0 0.0
    %454 = vmatprep.subr.mxu0 0.0
    %455 = vmatpush2.xpose.msra.mxu0 0.0
    %456 = vmatprep.mubr.f32.mxu0 0.0
    %457 = vmatmul.mubr.f32.gmra.mxu0 %v391
    %v458 = vpop.f32.mrf.mxu0
    %v459 = vadd.f32 0.0, %v458
    %v460 = vpop.f32.mrf.mxu0
    %461 = vdwg.mxu0
    %v462 = vld [vmem:[#allocation10 + $0x3] ss:$0 sm:$0xff]
    %464 = vset.pattern.permute.xlu0 0
    %465 = vperm.xlu0 %464, %v462
    %v466 = vpop.permute.xlu0 %465
    %v468 = vadd.f32 %v459, %v466
    %vm469 = vcmask 57344
    %470 = vst.msk [vmem:[#allocation11] sm:$0x1] %vm469, %v468
    // Predicated region
    $region46: #{dnn_forward.1} parent=1 // pred_check
      _
    $region47: #{dnn_forward.1} parent=1 // pred_check_branch
      %472 = sbr.rel (0) target = $region49
    $region48: #{dnn_forward.1} parent=1 // pred_region
      %s474 = ssub.s32 16, 16
      %475 = vsyncadd [#allocation4], %s474
      %s477 = sshll.u32 [#allocation11], 4
      %s478 = int_to_ptr.vmem [resolvable:$true] %s477
      %480 = dma.vmem_to_hbm [thread:$0]  %s478, 16, %s6, [#allocation4]
    $region49: #{dnn_forward.1} parent=1 // pred_fallthru
      _
    // Predicated region
    $region50: #{dnn_forward.1} parent=1 // pred_check
      _
    $region51: #{dnn_forward.1} parent=1 // pred_check_branch
      %482 = sbr.rel (0) target = $region53
    $region52: #{dnn_forward.1} parent=1 // pred_region
      %483 = dma.done [#allocation4], 16
    $region53: #{dnn_forward.1} parent=1 // pred_fallthru
      _
    %484 = vsyncpa [#allocation3], 1
    %485 = vsyncpa [#allocation6], 1
    %486 = vsyncpa [#allocation9], 1
    %487 = vsyncpa [#allocation4], 1

</llo_original>
